<compile_context>
chip_gen: v7x
topology: tpu7x:2x2x1
jax: 0.10.0
libtpu: 0.0.40
codegen_flags: <defaults>
</compile_context>

<pallas_src>
import functools

import jax
import jax.numpy as jnp
from jax import lax
from jax.experimental import pallas as pl
from jax.experimental.pallas import tpu as pltpu

# FocalLoss / SoftDiceLossSquared default hyper-parameters
ALPHA = 0.5
GAMMA = 2              # integer -> exact integer power (matches torch.pow semantics)
BALANCE_INDEX = 0
FOCAL_SMOOTH = 1e-5
DICE_SMOOTH = 1.0


def _cdiv(a, b):
    return -(-a // b)


def _round_up(a, b):
    return _cdiv(a, b) * b


def _padded_col_bytes(second_minor, dtype):
    """VMEM bytes per lane-column of a (..., second_minor, lanes) block, incl. sublane padding."""
    itemsize = jnp.dtype(dtype).itemsize
    sublanes = 8 * (4 // itemsize)          # 8 for f32/i32, 16 for bf16, 32 for i8
    return _round_up(second_minor, sublanes) * itemsize


def _dc_focal_kernel(x_ref, t_ref,
                     o_int_ref, o_den_ref, o_f_ref, o_c0_ref,
                     acc_xo, acc_den, acc_f, acc_c0,
                     *, n_slices, w_acc, tail_valid, unroll):
    """One grid step: stream a (B, C, tile) logit block + (B, tile) label block.

    Partial sums are carried through the inner fori_loop (so they stay in vregs); the narrow
    VMEM scratch accumulators are read/written once per grid step and persist across steps.
    """
    step = pl.program_id(0)
    n_steps = pl.num_programs(0)

    B, C, _ = x_ref.shape
    lo = FOCAL_SMOOTH / (C - 1)
    hi = 1.0 - FOCAL_SMOOTH

    @pl.when(step == 0)
    def _init():
        acc_xo[...] = jnp.zeros_like(acc_xo)
        acc_den[...] = jnp.zeros_like(acc_den)
        acc_f[...] = jnp.zeros_like(acc_f)
        acc_c0[...] = jnp.zeros_like(acc_c0)

    # Hoisted loop constants (JAX does not CSE broadcast/iota inside loops).
    c_iota = lax.broadcasted_iota(jnp.int32, (B, C, w_acc), 1)
    lane = lax.broadcasted_iota(jnp.int32, (B, w_acc), 1)

    def make_body(masked):
        def body(w, carry):
            a_xo, a_den, a_f, a_c0 = carry
            off = pl.multiple_of(w * w_acc, w_acc)
            xs = x_ref[:, :, pl.ds(off, w_acc)].astype(jnp.float32)     # (B, C, W)
            ts = t_ref[:, pl.ds(off, w_acc)].astype(jnp.int32)          # (B, W)
            if masked:
                # Final (ragged) block: lanes >= tail_valid read unspecified boundary data.
                # Zero the logits and push the label out of range so every contribution is 0.
                valid = (w * w_acc + lane) < tail_valid                  # (B, W) bool
                xs = jnp.where(valid[:, None, :], xs, 0.0)
                ts = jnp.where(valid, ts, C)

            # one-hot along the class (sublane) axis == torch scatter_(1, idx, 1);
            # onehot**2 == onehot so the squared denominator term is folded away.
            oh = (ts[:, None, :] == c_iota).astype(jnp.float32)          # (B, C, W)
            xo = xs * oh
            a_xo = a_xo + xo
            a_den = a_den + (xs * xs + oh)

            # Focal per-pixel term: pt = lo*sum_c(x) + (hi-lo)*sum_c(x*onehot) + smooth.
            sum_x = jnp.sum(xs, axis=1)                                  # (B, W) small C-reduce
            sum_xo = jnp.sum(xo, axis=1)                                 # (B, W)
            pt = lo * sum_x + (hi - lo) * sum_xo + FOCAL_SMOOTH
            omp = 1.0 - pt
            omp2 = omp * omp                                             # GAMMA == 2 -> exact
            if masked:
                omp2 = jnp.where(valid, omp2, 0.0)
            a_f = a_f + omp2
            # Balance-class pixel count (alpha mean reconstructed in the wrapper epilogue).
            a_c0 = a_c0 + oh[:, BALANCE_INDEX, :]
            return a_xo, a_den, a_f, a_c0
        return body

    def run(masked):
        carry = (acc_xo[...], acc_den[...], acc_f[...], acc_c0[...])
        carry = lax.fori_loop(0, n_slices, make_body(masked), carry, unroll=unroll)
        acc_xo[...], acc_den[...], acc_f[...], acc_c0[...] = carry

    if tail_valid is None:                 # HW is an exact multiple of the tile: never mask
        run(masked=False)
    else:
        @pl.when(step < n_steps - 1)
        def _interior():
            run(masked=False)

        @pl.when(step == n_steps - 1)
        def _tail():
            run(masked=True)

    @pl.when(step == n_steps - 1)
    def _finalize():
        # One cross-lane (XLU) reduce per accumulator, once for the whole kernel.
        o_int_ref[...] = jnp.sum(acc_xo[...], axis=2)                    # (B, C)
        o_den_ref[...] = jnp.sum(acc_den[...], axis=2)                   # (B, C)
        o_f_ref[...] = jnp.sum(acc_f[...], axis=1, keepdims=True)        # (B, 1)
        o_c0_ref[...] = jnp.sum(acc_c0[...], axis=1, keepdims=True)      # (B, 1)


def dc_and_focal_loss(net_output, target, *, tile_hw=None, acc_width=None,
                      vmem_budget_bytes=10 << 20):
    """net_output: (B, C, H, W) float (f32/bf16) logits; target: (B, 1, H, W) labels in [0, C)."""
    B, C, H, W = net_output.shape
    assert C >= 2, "FocalLoss smoothing uses smooth/(C-1); num_class >= 2 is required."
    HW = H * W

    x = net_output.reshape(B, C, HW)                        # native dtype; cast to f32 in-kernel
    label_dtype = jnp.int8 if C <= 127 else jnp.int32       # slim label stream
    t = target.reshape(B, HW).astype(label_dtype)

    # Accumulator lane width: wide enough for VPU efficiency, narrow enough that the carried
    # partial sums stay inside the 64-vreg budget for the given B*C.
    if acc_width is None:
        bc = B * C
        acc_width = 512 if bc <= 16 else (256 if bc <= 64 else 128)
    w_acc = max(128, min(_round_up(acc_width, 128), _round_up(HW, 128)))

    # Grid block size: large enough to amortize per-grid-step overhead, small enough that
    # 2x(x block) + 2x(label block) + scratch stays well inside v5e's 16 MiB default scoped
    # VMEM (and v7x's 32 MiB of 64 MiB physical).  Sublane padding of both streams is counted.
    if tile_hw is None:
        per_px = 2 * (B * _padded_col_bytes(C, x.dtype) + _padded_col_bytes(B, t.dtype))
        tile_hw = vmem_budget_bytes // max(per_px, 1)
        tile_hw = min(tile_hw, 131072)
    tile = max(w_acc, (tile_hw // w_acc) * w_acc)            # multiple of w_acc (and of 128)
    tile = min(tile, _round_up(HW, w_acc))

    n_tiles = _cdiv(HW, tile)
    rem = HW - (n_tiles - 1) * tile
    tail_valid = None if rem == tile else rem                # None => no ragged tail anywhere
    n_slices = tile // w_acc
    unroll = True if n_slices <= 16 else 8

    kernel = functools.partial(
        _dc_focal_kernel,
        n_slices=n_slices, w_acc=w_acc, tail_valid=tail_valid, unroll=unroll)

    out_shapes = (
        jax.ShapeDtypeStruct((B, C), jnp.float32),   # sum_hw x*onehot
        jax.ShapeDtypeStruct((B, C), jnp.float32),   # sum_hw x^2 + onehot
        jax.ShapeDtypeStruct((B, 1), jnp.float32),   # sum_hw (1-pt)^2   (tail-masked)
        jax.ShapeDtypeStruct((B, 1), jnp.float32),   # count of balance-index pixels
    )

    o_int, o_den, o_f, o_c0 = pl.pallas_call(
        kernel,
        out_shape=out_shapes,
        grid_spec=pltpu.PrefetchScalarGridSpec(
            num_scalar_prefetch=0,
            grid=(n_tiles,),
            in_specs=[
                pl.BlockSpec((B, C, tile), lambda i: (0, 0, i)),
                pl.BlockSpec((B, tile), lambda i: (0, i)),
            ],
            out_specs=[
                pl.BlockSpec((B, C), lambda i: (0, 0)),
                pl.BlockSpec((B, C), lambda i: (0, 0)),
                pl.BlockSpec((B, 1), lambda i: (0, 0)),
                pl.BlockSpec((B, 1), lambda i: (0, 0)),
            ],
            scratch_shapes=[
                pltpu.VMEM((B, C, w_acc), jnp.float32),   # acc_xo
                pltpu.VMEM((B, C, w_acc), jnp.float32),   # acc_den
                pltpu.VMEM((B, w_acc), jnp.float32),      # acc_f
                pltpu.VMEM((B, w_acc), jnp.float32),      # acc_c0 (balance-class count)
            ],
        ),
        compiler_params=pltpu.CompilerParams(
            dimension_semantics=("arbitrary",),
        ),
    )(x, t)

    # Tiny scalar epilogue combining the partial sums.
    n_pix = float(B * HW)
    intersect = o_int + DICE_SMOOTH                          # (B, C)
    denom = o_den + DICE_SMOOTH                              # (B, C)
    dc_loss = 1.0 - jnp.mean(2.0 * intersect / denom)
    focal_term = jnp.sum(o_f) / n_pix                        # mean_i (1-pt_i)^gamma
    count0 = jnp.sum(o_c0)                                   # #pixels with label == balance_index
    alpha_mean = (ALPHA * count0 + (1.0 - ALPHA) * (n_pix - count0)) / n_pix
    focal_loss = 1.0 + alpha_mean * focal_term
    return 1.0 + 0.7 * dc_loss + 0.3 * focal_loss


def _reference(net_output, target):
    """Pure-JAX reference mirroring the PyTorch forward exactly."""
    x = net_output.astype(jnp.float32)
    t = target.astype(jnp.int32)
    B, C, H, W = x.shape
    onehot = (t == jnp.arange(C, dtype=jnp.int32).reshape(1, C, 1, 1)).astype(jnp.float32)

    intersect = jnp.sum(x * onehot, axis=(2, 3)) + DICE_SMOOTH
    denom = jnp.sum(x * x + onehot * onehot, axis=(2, 3)) + DICE_SMOOTH
    dc_loss = 1.0 - jnp.mean(2.0 * intersect / denom)

    s = FOCAL_SMOOTH
    oh = jnp.clip(onehot, s / (C - 1), 1.0 - s)
    pt = jnp.sum(oh * x, axis=1) + s                               # (B, H, W)
    alpha_pix = jnp.where(t[:, 0] == BALANCE_INDEX, ALPHA, 1.0 - ALPHA)
    focal_loss = 1.0 + jnp.mean(alpha_pix) * jnp.mean((1.0 - pt) ** GAMMA)

    return 1.0 + 0.7 * dc_loss + 0.3 * focal_loss


if __name__ == "__main__":
    key = jax.random.PRNGKey(0)
    k1, k2, k3, k4, k5, k6 = jax.random.split(key, 6)

    # Case 1: exact-multiple spatial size, forced multi-step grid (unmasked accumulation path).
    B, C, H, W = 2, 4, 16, 16
    x1 = jax.random.normal(k1, (B, C, H, W), dtype=jnp.float32)
    t1 = jax.random.randint(k2, (B, 1, H, W), 0, C, dtype=jnp.int32)
    out1 = jax.block_until_ready(dc_and_focal_loss(x1, t1, tile_hw=128, acc_width=128))
    ref1 = _reference(x1, t1)
    assert jnp.allclose(out1, ref1, rtol=1e-5, atol=1e-5), (out1, ref1)

    # Case 1b: same inputs through the auto-sized single-step path.
    out1b = jax.block_until_ready(dc_and_focal_loss(x1, t1))
    assert jnp.allclose(out1b, ref1, rtol=1e-5, atol=1e-5), (out1b, ref1)

    # Case 2: ragged spatial size; single partial (masked) boundary block, no wrapper padding.
    B, C, H, W = 2, 4, 17, 19
    x2 = jax.random.normal(k3, (B, C, H, W), dtype=jnp.float32)
    t2 = jax.random.randint(k4, (B, 1, H, W), 0, C, dtype=jnp.int32)
    out2 = jax.block_until_ready(dc_and_focal_loss(x2, t2))
    ref2 = _reference(x2, t2)
    assert jnp.allclose(out2, ref2, rtol=1e-5, atol=1e-5), (out2, ref2)

    # Case 3: bf16 logits, multi-step grid with interior tiles, multi-slice inner loop,
    #         ragged masked tail, int8 labels.
    B, C, H, W = 2, 4, 40, 37
    x3 = jax.random.normal(k5, (B, C, H, W), dtype=jnp.bfloat16)
    t3 = jax.random.randint(k6, (B, 1, H, W), 0, C, dtype=jnp.int32)
    out3 = jax.block_until_ready(dc_and_focal_loss(x3, t3, tile_hw=256, acc_width=128))
    ref3 = _reference(x3, t3)
    assert jnp.allclose(out3, ref3, rtol=1e-5, atol=1e-5), (out3, ref3)

    print("KERNEL_OK")
</pallas_src>

<mosaic_0001>
module attributes {stable_mosaic.version = 11 : i64} {
  func.func @_dc_focal_kernel(%arg0: i32, %arg1: memref<2x4x128xf32, #tpu.memory_space<vmem>>, %arg2: memref<2x128xi8, #tpu.memory_space<vmem>>, %arg3: memref<2x4xf32, #tpu.memory_space<vmem>>, %arg4: memref<2x4xf32, #tpu.memory_space<vmem>>, %arg5: memref<2x1xf32, #tpu.memory_space<vmem>>, %arg6: memref<2x1xf32, #tpu.memory_space<vmem>>, %arg7: memref<2x4x128xf32, #tpu.memory_space<vmem>>, %arg8: memref<2x4x128xf32, #tpu.memory_space<vmem>>, %arg9: memref<2x128xf32, #tpu.memory_space<vmem>>, %arg10: memref<2x128xf32, #tpu.memory_space<vmem>>) attributes {dimension_semantics = [#tpu.dimension_semantics<arbitrary>], iteration_bounds = array<i64: 2>, scalar_prefetch = 0 : i64, scratch_operands = 4 : i64, tpu.core_type = #tpu.core_type<tc>, window_params = [{transform_indices = @transform_0, window_bounds = array<i64: 2, 4, 128>}, {transform_indices = @transform_1, window_bounds = array<i64: 2, 128>}, {pipeline_mode = #tpu.pipeline_mode<synchronous>, transform_indices = @transform_2, window_bounds = array<i64: 2, 4>}, {pipeline_mode = #tpu.pipeline_mode<synchronous>, transform_indices = @transform_3, window_bounds = array<i64: 2, 4>}, {pipeline_mode = #tpu.pipeline_mode<synchronous>, transform_indices = @transform_4, window_bounds = array<i64: 2, 1>}, {pipeline_mode = #tpu.pipeline_mode<synchronous>, transform_indices = @transform_5, window_bounds = array<i64: 2, 1>}]} {
    %c0_i32 = arith.constant 0 : i32
    %0 = arith.cmpi eq, %arg0, %c0_i32 : i32
    %1 = arith.extui %0 : i1 to i32
    %c0_i32_0 = arith.constant 0 : i32
    %2 = arith.cmpi ne, %1, %c0_i32_0 : i32
    scf.if %2 {
      %cst_31 = arith.constant 0.000000e+00 : f32
      %48 = vector.broadcast %cst_31 : f32 to vector<2x4x128xf32>
      %c0_32 = arith.constant 0 : index
      %c0_33 = arith.constant 0 : index
      %c0_34 = arith.constant 0 : index
      %49 = vector.load %arg7[%c0_32, %c0_33, %c0_34] : memref<2x4x128xf32, #tpu.memory_space<vmem>>, vector<2x4x128xf32>
      tpu.vector_store %arg7[%c0_32, %c0_33, %c0_34], %48 {strides = array<i32>} : memref<2x4x128xf32, #tpu.memory_space<vmem>>, vector<2x4x128xf32>,
      %cst_35 = arith.constant 0.000000e+00 : f32
      %50 = vector.broadcast %cst_35 : f32 to vector<2x4x128xf32>
      %c0_36 = arith.constant 0 : index
      %c0_37 = arith.constant 0 : index
      %c0_38 = arith.constant 0 : index
      %51 = vector.load %arg8[%c0_36, %c0_37, %c0_38] : memref<2x4x128xf32, #tpu.memory_space<vmem>>, vector<2x4x128xf32>
      tpu.vector_store %arg8[%c0_36, %c0_37, %c0_38], %50 {strides = array<i32>} : memref<2x4x128xf32, #tpu.memory_space<vmem>>, vector<2x4x128xf32>,
      %cst_39 = arith.constant 0.000000e+00 : f32
      %52 = vector.broadcast %cst_39 : f32 to vector<2x128xf32>
      %c0_40 = arith.constant 0 : index
      %c0_41 = arith.constant 0 : index
      %53 = vector.load %arg9[%c0_40, %c0_41] : memref<2x128xf32, #tpu.memory_space<vmem>>, vector<2x128xf32>
      tpu.vector_store %arg9[%c0_40, %c0_41], %52 {strides = array<i32>} : memref<2x128xf32, #tpu.memory_space<vmem>>, vector<2x128xf32>,
      %cst_42 = arith.constant 0.000000e+00 : f32
      %54 = vector.broadcast %cst_42 : f32 to vector<2x128xf32>
      %c0_43 = arith.constant 0 : index
      %c0_44 = arith.constant 0 : index
      %55 = vector.load %arg10[%c0_43, %c0_44] : memref<2x128xf32, #tpu.memory_space<vmem>>, vector<2x128xf32>
      tpu.vector_store %arg10[%c0_43, %c0_44], %54 {strides = array<i32>} : memref<2x128xf32, #tpu.memory_space<vmem>>, vector<2x128xf32>,
    } else {
    }
    %3 = tpu.iota {dimensions = array<i32: 1>} : vector<2x4x128xi32>
    %c0 = arith.constant 0 : index
    %c0_1 = arith.constant 0 : index
    %c0_2 = arith.constant 0 : index
    %4 = vector.load %arg7[%c0, %c0_1, %c0_2] : memref<2x4x128xf32, #tpu.memory_space<vmem>>, vector<2x4x128xf32>
    %c0_3 = arith.constant 0 : index
    %c0_4 = arith.constant 0 : index
    %c0_5 = arith.constant 0 : index
    %5 = vector.load %arg8[%c0_3, %c0_4, %c0_5] : memref<2x4x128xf32, #tpu.memory_space<vmem>>, vector<2x4x128xf32>
    %c0_6 = arith.constant 0 : index
    %c0_7 = arith.constant 0 : index
    %6 = vector.load %arg9[%c0_6, %c0_7] : memref<2x128xf32, #tpu.memory_space<vmem>>, vector<2x128xf32>
    %c0_8 = arith.constant 0 : index
    %c0_9 = arith.constant 0 : index
    %7 = vector.load %arg10[%c0_8, %c0_9] : memref<2x128xf32, #tpu.memory_space<vmem>>, vector<2x128xf32>
    %c0_i32_10 = arith.constant 0 : i32
    %c128_i32 = arith.constant 128 : i32
    %8 = arith.muli %c0_i32_10, %c128_i32 : i32
    %9 = tpu.assume_multiple %8, 128 : i32
    %c0_11 = arith.constant 0 : index
    %c0_12 = arith.constant 0 : index
    %10 = arith.index_cast %9 : i32 to index
    %11 = vector.load %arg1[%c0_11, %c0_12, %10] : memref<2x4x128xf32, #tpu.memory_space<vmem>>, vector<2x4x128xf32>
    %c0_13 = arith.constant 0 : index
    %12 = arith.index_cast %9 : i32 to index
    %13 = vector.load %arg2[%c0_13, %12] : memref<2x128xi8, #tpu.memory_space<vmem>>, vector<2x128xi8>
    %14 = arith.extsi %13 : vector<2x128xi8> to vector<2x128xi32>
    %15 = vector.shape_cast %14 : vector<2x128xi32> to vector<2x1x128xi32>
    %16 = vector.broadcast %15 : vector<2x1x128xi32> to vector<2x4x128xi32>
    %17 = arith.cmpi eq, %16, %3 : vector<2x4x128xi32>
    %18 = arith.extui %17 : vector<2x4x128xi1> to vector<2x4x128xi32>
    %19 = arith.sitofp %18 : vector<2x4x128xi32> to vector<2x4x128xf32>
    %20 = arith.mulf %11, %19 : vector<2x4x128xf32>
    %21 = arith.addf %4, %20 : vector<2x4x128xf32>
    %22 = arith.mulf %11, %11 : vector<2x4x128xf32>
    %23 = arith.addf %22, %19 : vector<2x4x128xf32>
    %24 = arith.addf %5, %23 : vector<2x4x128xf32>
    %cst = arith.constant dense<0.000000e+00> : vector<2x128xf32>
    %25 = vector.multi_reduction <add>, %11, %cst [1] : vector<2x4x128xf32> to vector<2x128xf32>
    %cst_14 = arith.constant dense<0.000000e+00> : vector<2x128xf32>
    %26 = vector.multi_reduction <add>, %20, %cst_14 [1] : vector<2x4x128xf32> to vector<2x128xf32>
    %cst_15 = arith.constant 3.33333332E-6 : f32
    %27 = vector.broadcast %cst_15 : f32 to vector<2x128xf32>
    %28 = arith.mulf %27, %25 : vector<2x128xf32>
    %cst_16 = arith.constant 0.999986648 : f32
    %29 = vector.broadcast %cst_16 : f32 to vector<2x128xf32>
    %30 = arith.mulf %29, %26 : vector<2x128xf32>
    %31 = arith.addf %28, %30 : vector<2x128xf32>
    %cst_17 = arith.constant 9.99999974E-6 : f32
    %32 = vector.broadcast %cst_17 : f32 to vector<2x128xf32>
    %33 = arith.addf %31, %32 : vector<2x128xf32>
    %cst_18 = arith.constant 1.000000e+00 : f32
    %34 = vector.broadcast %cst_18 : f32 to vector<2x128xf32>
    %35 = arith.subf %34, %33 : vector<2x128xf32>
    %36 = arith.mulf %35, %35 : vector<2x128xf32>
    %37 = arith.addf %6, %36 : vector<2x128xf32>
    %38 = vector.extract_strided_slice %19 {offsets = [0, 0, 0], sizes = [2, 1, 128], strides = [1, 1, 1]} : vector<2x4x128xf32> to vector<2x1x128xf32>
    %39 = vector.shape_cast %38 : vector<2x1x128xf32> to vector<2x128xf32>
    %40 = arith.addf %7, %39 : vector<2x128xf32>
    %c1_i32 = arith.constant 1 : i32
    %c0_19 = arith.constant 0 : index
    %c0_20 = arith.constant 0 : index
    %c0_21 = arith.constant 0 : index
    %41 = vector.load %arg7[%c0_19, %c0_20, %c0_21] : memref<2x4x128xf32, #tpu.memory_space<vmem>>, vector<2x4x128xf32>
    tpu.vector_store %arg7[%c0_19, %c0_20, %c0_21], %21 {strides = array<i32>} : memref<2x4x128xf32, #tpu.memory_space<vmem>>, vector<2x4x128xf32>,
    %c0_22 = arith.constant 0 : index
    %c0_23 = arith.constant 0 : index
    %c0_24 = arith.constant 0 : index
    %42 = vector.load %arg8[%c0_22, %c0_23, %c0_24] : memref<2x4x128xf32, #tpu.memory_space<vmem>>, vector<2x4x128xf32>
    tpu.vector_store %arg8[%c0_22, %c0_23, %c0_24], %24 {strides = array<i32>} : memref<2x4x128xf32, #tpu.memory_space<vmem>>, vector<2x4x128xf32>,
    %c0_25 = arith.constant 0 : index
    %c0_26 = arith.constant 0 : index
    %43 = vector.load %arg9[%c0_25, %c0_26] : memref<2x128xf32, #tpu.memory_space<vmem>>, vector<2x128xf32>
    tpu.vector_store %arg9[%c0_25, %c0_26], %37 {strides = array<i32>} : memref<2x128xf32, #tpu.memory_space<vmem>>, vector<2x128xf32>,
    %c0_27 = arith.constant 0 : index
    %c0_28 = arith.constant 0 : index
    %44 = vector.load %arg10[%c0_27, %c0_28] : memref<2x128xf32, #tpu.memory_space<vmem>>, vector<2x128xf32>
    tpu.vector_store %arg10[%c0_27, %c0_28], %40 {strides = array<i32>} : memref<2x128xf32, #tpu.memory_space<vmem>>, vector<2x128xf32>,
    %c1_i32_29 = arith.constant 1 : i32
    %45 = arith.cmpi eq, %arg0, %c1_i32_29 : i32
    %46 = arith.extui %45 : i1 to i32
    %c0_i32_30 = arith.constant 0 : i32
    %47 = arith.cmpi ne, %46, %c0_i32_30 : i32
    scf.if %47 {
      %c0_31 = arith.constant 0 : index
      %c0_32 = arith.constant 0 : index
      %c0_33 = arith.constant 0 : index
      %48 = vector.load %arg7[%c0_31, %c0_32, %c0_33] : memref<2x4x128xf32, #tpu.memory_space<vmem>>, vector<2x4x128xf32>
      %cst_34 = arith.constant dense<0.000000e+00> : vector<2x4xf32>
      %49 = vector.multi_reduction <add>, %48, %cst_34 [2] : vector<2x4x128xf32> to vector<2x4xf32>
      %c0_35 = arith.constant 0 : index
      %c0_36 = arith.constant 0 : index
      %50 = vector.load %arg3[%c0_35, %c0_36] : memref<2x4xf32, #tpu.memory_space<vmem>>, vector<2x4xf32>
      tpu.vector_store %arg3[%c0_35, %c0_36], %49 {strides = array<i32>} : memref<2x4xf32, #tpu.memory_space<vmem>>, vector<2x4xf32>,
      %c0_37 = arith.constant 0 : index
      %c0_38 = arith.constant 0 : index
      %c0_39 = arith.constant 0 : index
      %51 = vector.load %arg8[%c0_37, %c0_38, %c0_39] : memref<2x4x128xf32, #tpu.memory_space<vmem>>, vector<2x4x128xf32>
      %cst_40 = arith.constant dense<0.000000e+00> : vector<2x4xf32>
      %52 = vector.multi_reduction <add>, %51, %cst_40 [2] : vector<2x4x128xf32> to vector<2x4xf32>
      %c0_41 = arith.constant 0 : index
      %c0_42 = arith.constant 0 : index
      %53 = vector.load %arg4[%c0_41, %c0_42] : memref<2x4xf32, #tpu.memory_space<vmem>>, vector<2x4xf32>
      tpu.vector_store %arg4[%c0_41, %c0_42], %52 {strides = array<i32>} : memref<2x4xf32, #tpu.memory_space<vmem>>, vector<2x4xf32>,
      %c0_43 = arith.constant 0 : index
      %c0_44 = arith.constant 0 : index
      %54 = vector.load %arg9[%c0_43, %c0_44] : memref<2x128xf32, #tpu.memory_space<vmem>>, vector<2x128xf32>
      %cst_45 = arith.constant dense<0.000000e+00> : vector<2xf32>
      %55 = vector.multi_reduction <add>, %54, %cst_45 [1] : vector<2x128xf32> to vector<2xf32>
      %56 = vector.shape_cast %55 : vector<2xf32> to vector<2x1xf32>
      %c0_46 = arith.constant 0 : index
      %c0_47 = arith.constant 0 : index
      %57 = vector.load %arg5[%c0_46, %c0_47] : memref<2x1xf32, #tpu.memory_space<vmem>>, vector<2x1xf32>
      tpu.vector_store %arg5[%c0_46, %c0_47], %56 {strides = array<i32>} : memref<2x1xf32, #tpu.memory_space<vmem>>, vector<2x1xf32>,
      %c0_48 = arith.constant 0 : index
      %c0_49 = arith.constant 0 : index
      %58 = vector.load %arg10[%c0_48, %c0_49] : memref<2x128xf32, #tpu.memory_space<vmem>>, vector<2x128xf32>
      %cst_50 = arith.constant dense<0.000000e+00> : vector<2xf32>
      %59 = vector.multi_reduction <add>, %58, %cst_50 [1] : vector<2x128xf32> to vector<2xf32>
      %60 = vector.shape_cast %59 : vector<2xf32> to vector<2x1xf32>
      %c0_51 = arith.constant 0 : index
      %c0_52 = arith.constant 0 : index
      %61 = vector.load %arg6[%c0_51, %c0_52] : memref<2x1xf32, #tpu.memory_space<vmem>>, vector<2x1xf32>
      tpu.vector_store %arg6[%c0_51, %c0_52], %60 {strides = array<i32>} : memref<2x1xf32, #tpu.memory_space<vmem>>, vector<2x1xf32>,
    } else {
    }
    return
  }
  func.func @transform_0(%arg0: i32) -> (i32, i32, i32) {
    %c0_i32 = arith.constant 0 : i32
    %c0_i32_0 = arith.constant 0 : i32
    %c0_i32_1 = arith.constant 0 : i32
    return %c0_i32, %c0_i32_0, %arg0 : i32, i32, i32
  }
  func.func @transform_1(%arg0: i32) -> (i32, i32) {
    %c0_i32 = arith.constant 0 : i32
    %c0_i32_0 = arith.constant 0 : i32
    return %c0_i32, %arg0 : i32, i32
  }
  func.func @transform_2(%arg0: i32) -> (i32, i32) {
    %c0_i32 = arith.constant 0 : i32
    %c0_i32_0 = arith.constant 0 : i32
    %c0_i32_1 = arith.constant 0 : i32
    return %c0_i32, %c0_i32_0 : i32, i32
  }
  func.func @transform_3(%arg0: i32) -> (i32, i32) {
    %c0_i32 = arith.constant 0 : i32
    %c0_i32_0 = arith.constant 0 : i32
    %c0_i32_1 = arith.constant 0 : i32
    return %c0_i32, %c0_i32_0 : i32, i32
  }
  func.func @transform_4(%arg0: i32) -> (i32, i32) {
    %c0_i32 = arith.constant 0 : i32
    %c0_i32_0 = arith.constant 0 : i32
    %c0_i32_1 = arith.constant 0 : i32
    return %c0_i32, %c0_i32_0 : i32, i32
  }
  func.func @transform_5(%arg0: i32) -> (i32, i32) {
    %c0_i32 = arith.constant 0 : i32
    %c0_i32_0 = arith.constant 0 : i32
    %c0_i32_1 = arith.constant 0 : i32
    return %c0_i32, %c0_i32_0 : i32, i32
  }
}

</mosaic_0001>

<llo_original>
// kernel: tpu_custom_call.1
$region0: #{tpu_custom_call.1}
  #allocation0 [shape = 'u32[]', space=smem, size = 0x4, offset = 0x4, fixed_abs, tag = 'smem constant byte address 0x4 - core index']
  #allocation1 [shape = 'u32[144,128]{1,0:T(1,128)}', space=vmem, size = 0x12000, scoped, tag = 'internal scratch']
  #allocation2 [shape = 'f32[2,4,128]{2,1,0:T(4,128)}', space=vmem, size = 0x1000, scoped, tag = 'scratch operand']
  #allocation3 [shape = 'f32[2,4,128]{2,1,0:T(4,128)}', space=vmem, size = 0x1000, scoped, tag = 'scratch operand']
  #allocation4 [shape = 'f32[2,128]{1,0:T(2,128)}', space=vmem, size = 0x400, scoped, tag = 'scratch operand']
  #allocation5 [shape = 'f32[2,128]{1,0:T(2,128)}', space=vmem, size = 0x400, scoped, tag = 'scratch operand']
  %s0 = inlined_call_operand.hbm [shape: f32[2,4,256], index: 0, kind: input, shape index: {}]
  %s1 = inlined_call_operand.vmem [shape: s8[2,256], index: 1, kind: input, shape index: {}]
  %s2 = inlined_call_operand.hbm [shape: f32[2,4], index: 2, kind: output, shape index: {0}]
  %s3 = inlined_call_operand.hbm [shape: f32[2,4], index: 3, kind: output, shape index: {1}]
  %s4 = inlined_call_operand.vmem [shape: f32[2,1], index: 4, kind: output, shape index: {2}]
  %s5 = inlined_call_operand.vmem [shape: f32[2,1], index: 5, kind: output, shape index: {3}]
  %6 = xla_tuple %s2, %s3, %s4, %s5
  %s7 = sld [smem:[#allocation0]]
  $region77: #{tpu_custom_call.1} parent=0
    _
  %s9 = ssub.s32 1, %s7
  %s10 = scalar_select 0, %s9, %s7
  $region1: #{tpu_custom_call.1} parent=0
    #allocation6 [shape = 'u8[8192]{0}', space=vmem, size = 0x2000, scoped, tag = 'input window, operand 0']
    #allocation7 [shape = 's32[2]{0}', space=sflag, size = 0x8, scoped, tag = 'scoped memory for tpu_custom_call.1']
    #allocation8 [shape = 's32[2]{0}', space=sflag, size = 0x8, scoped, tag = 'scoped memory for tpu_custom_call.1']
    #allocation9 [shape = 'u8[1024]{0}', space=vmem, size = 0x400, scoped, tag = 'output window, operand 0, single buffered']
    #allocation10 [shape = 'u8[1024]{0}', space=vmem, size = 0x400, scoped, tag = 'output window, operand 1, single buffered']
    #allocation11 [shape = 's32[1]{0}', space=sflag, size = 0x4, scoped, tag = 'scoped memory for tpu_custom_call.1']
    %11 = vsyncpa [#allocation7], 0
    %s12 = scalar_lea.sflag [#allocation7], 1
    %13 = vsyncpa %s12, 0
    %14 = vsyncpa [#allocation8], 0
    %15 = vsyncpa [#allocation11], 0
    loop: start=0, step=1, limit=4
    $region2: #{tpu_custom_call.1} parent=1 // loop_pre_header
      _
    $region3: #{tpu_custom_call.1} parent=1 // loop_header
      %s17 = sphi 0, %s21
      %p18 = scmp.ge.s32.totalorder %s17, 4
      %s27 = sphi 0, %s29
      %s30 = sphi 0, %s27
      %s31 = sphi 0, %s30
      %s47 = sphi 0, %s31
      %s53 = sphi 0, %s55
      %s56 = sphi 0, %s53
      %s57 = sphi 0, %s56
      %s73 = sphi 0, %s57
      %s77 = sphi 0, %s77
      %s79 = sphi 0, %s77
      %s80 = sphi 0, %s79
      %s94 = sphi 0, %s80
      %s98 = sphi 0, %s98
      %s100 = sphi 0, %s98
      %s101 = sphi 0, %s100
      %s115 = sphi 0, %s101
      %s119 = sphi 0, %s119
      %s121 = sphi 0, %s119
      %s122 = sphi 0, %s121
      %s136 = sphi 0, %s122
      %s140 = sphi 0, %s140
      %s142 = sphi 0, %s140
      %s143 = sphi 0, %s142
      %s157 = sphi 0, %s143
    $region4: #{tpu_custom_call.1} parent=1 // loop_header_branch
      %20 = sbr.rel (%p18) target = $region8
    $region5: #{tpu_custom_call.1} parent=1 // loop_body
      %s22 = ssub.s32 %s17, 1
      %s23 = ssub.s32 %s17, 2
      %s24 = sadd.s32 %s17, 1
      %s25 = ssub.s32 %s17, %s24
      %p26 = scmp.eq.s32.totalorder %s25, 0
      %s28 = sadd.s32 %s27, 1
      %s29 = scalar_select %p26, %s27, %s28
      %p32 = pneg %p26
      %p33 = scmp.eq.s32.totalorder %s17, 1
      %p34 = por %p32, %p33
      %p35 = scmp.ne.s32.totalorder %s27, %s30
      %p36 = scmp.eq.s32.totalorder %s17, 0
      %p37 = por %p35, %p36
      %p38 = scmp.ne.s32.totalorder %s27, %s30
      %p39 = scmp.eq.s32.totalorder %s22, 1
      %p40 = por %p38, %p39
      %p41 = scmp.ne.s32.totalorder %s30, %s31
      %p42 = scmp.eq.s32.totalorder %s22, 0
      %p43 = por %p41, %p42
      %p44 = scmp.ne.s32.totalorder %s30, %s31
      %p45 = scmp.eq.s32.totalorder %s23, 1
      %p46 = por %p44, %p45
      %p48 = scmp.ne.s32.totalorder %s31, %s47
      %p49 = scmp.eq.s32.totalorder %s23, 0
      %p50 = por %p48, %p49
      %s51 = ssub.s32 %s17, %s24
      %p52 = scmp.eq.s32.totalorder %s51, 0
      %s54 = sadd.s32 %s53, 1
      %s55 = scalar_select %p52, %s53, %s54
      %p58 = pneg %p52
      %p59 = scmp.eq.s32.totalorder %s17, 1
      %p60 = por %p58, %p59
      %p61 = scmp.ne.s32.totalorder %s53, %s56
      %p62 = scmp.eq.s32.totalorder %s17, 0
      %p63 = por %p61, %p62
      %p64 = scmp.ne.s32.totalorder %s53, %s56
      %p65 = scmp.eq.s32.totalorder %s22, 1
      %p66 = por %p64, %p65
      %p67 = scmp.ne.s32.totalorder %s56, %s57
      %p68 = scmp.eq.s32.totalorder %s22, 0
      %p69 = por %p67, %p68
      %p70 = scmp.ne.s32.totalorder %s56, %s57
      %p71 = scmp.eq.s32.totalorder %s23, 1
      %p72 = por %p70, %p71
      %p74 = scmp.ne.s32.totalorder %s57, %s73
      %p75 = scmp.eq.s32.totalorder %s23, 0
      %p76 = por %p74, %p75
      %s78 = sadd.s32 %s77, 1
      %p81 = scmp.eq.s32.totalorder %s17, 1
      %p82 = scmp.ne.s32.totalorder %s77, %s79
      %p83 = scmp.eq.s32.totalorder %s17, 0
      %p84 = por %p82, %p83
      %p85 = scmp.ne.s32.totalorder %s77, %s79
      %p86 = scmp.eq.s32.totalorder %s22, 1
      %p87 = por %p85, %p86
      %p88 = scmp.ne.s32.totalorder %s79, %s80
      %p89 = scmp.eq.s32.totalorder %s22, 0
      %p90 = por %p88, %p89
      %p91 = scmp.ne.s32.totalorder %s79, %s80
      %p92 = scmp.eq.s32.totalorder %s23, 1
      %p93 = por %p91, %p92
      %p95 = scmp.ne.s32.totalorder %s80, %s94
      %p96 = scmp.eq.s32.totalorder %s23, 0
      %p97 = por %p95, %p96
      %s99 = sadd.s32 %s98, 1
      %p102 = scmp.eq.s32.totalorder %s17, 1
      %p103 = scmp.ne.s32.totalorder %s98, %s100
      %p104 = scmp.eq.s32.totalorder %s17, 0
      %p105 = por %p103, %p104
      %p106 = scmp.ne.s32.totalorder %s98, %s100
      %p107 = scmp.eq.s32.totalorder %s22, 1
      %p108 = por %p106, %p107
      %p109 = scmp.ne.s32.totalorder %s100, %s101
      %p110 = scmp.eq.s32.totalorder %s22, 0
      %p111 = por %p109, %p110
      %p112 = scmp.ne.s32.totalorder %s100, %s101
      %p113 = scmp.eq.s32.totalorder %s23, 1
      %p114 = por %p112, %p113
      %p116 = scmp.ne.s32.totalorder %s101, %s115
      %p117 = scmp.eq.s32.totalorder %s23, 0
      %p118 = por %p116, %p117
      %s120 = sadd.s32 %s119, 1
      %p123 = scmp.eq.s32.totalorder %s17, 1
      %p124 = scmp.ne.s32.totalorder %s119, %s121
      %p125 = scmp.eq.s32.totalorder %s17, 0
      %p126 = por %p124, %p125
      %p127 = scmp.ne.s32.totalorder %s119, %s121
      %p128 = scmp.eq.s32.totalorder %s22, 1
      %p129 = por %p127, %p128
      %p130 = scmp.ne.s32.totalorder %s121, %s122
      %p131 = scmp.eq.s32.totalorder %s22, 0
      %p132 = por %p130, %p131
      %p133 = scmp.ne.s32.totalorder %s121, %s122
      %p134 = scmp.eq.s32.totalorder %s23, 1
      %p135 = por %p133, %p134
      %p137 = scmp.ne.s32.totalorder %s122, %s136
      %p138 = scmp.eq.s32.totalorder %s23, 0
      %p139 = por %p137, %p138
      %s141 = sadd.s32 %s140, 1
      %p144 = scmp.eq.s32.totalorder %s17, 1
      %p145 = scmp.ne.s32.totalorder %s140, %s142
      %p146 = scmp.eq.s32.totalorder %s17, 0
      %p147 = por %p145, %p146
      %p148 = scmp.ne.s32.totalorder %s140, %s142
      %p149 = scmp.eq.s32.totalorder %s22, 1
      %p150 = por %p148, %p149
      %p151 = scmp.ne.s32.totalorder %s142, %s143
      %p152 = scmp.eq.s32.totalorder %s22, 0
      %p153 = por %p151, %p152
      %p154 = scmp.ne.s32.totalorder %s142, %s143
      %p155 = scmp.eq.s32.totalorder %s23, 1
      %p156 = por %p154, %p155
      %p158 = scmp.ne.s32.totalorder %s143, %s157
      %p159 = scmp.eq.s32.totalorder %s23, 0
      %p160 = por %p158, %p159
      %p161 = scmp.le.s32.totalorder 1, %s17
      %p162 = scmp.lt.s32.totalorder %s17, 3
      %p163 = pnand %p161, %p162
      %p164 = pneg %p163
      // Predicated region
      $region9: #{tpu_custom_call.1} parent=5 // pred_check
        _
      $region10: #{tpu_custom_call.1} parent=5 // pred_check_branch
        %166 = sbr.rel (%p163) target = $region12
      $region11: #{tpu_custom_call.1} parent=5 // pred_region
        %s167 = ssub.s32 %s17, 1
      $region12: #{tpu_custom_call.1} parent=5 // pred_fallthru
        _
      %p168 = scmp.lt.s32.totalorder %s17, 2
      // Predicated region
      $region13: #{tpu_custom_call.1} parent=5 // pred_check
        %p169 = pneg %p168
      $region14: #{tpu_custom_call.1} parent=5 // pred_check_branch
        %171 = sbr.rel (%p169) target = $region16
      $region15: #{tpu_custom_call.1} parent=5 // pred_region
        // Predicated region
        $region17: #{tpu_custom_call.1} parent=15 // pred_check
          %p172 = pneg %p37
        $region18: #{tpu_custom_call.1} parent=15 // pred_check_branch
          %174 = sbr.rel (%p172) target = $region20
        $region19: #{tpu_custom_call.1} parent=15 // pred_region
          %s175 = sand.u32 %s27, 1
          %s176 = scalar_lea.sflag [#allocation7], %s175
          %s177 = sand.u32 %s27, 1
          %s178 = smul.addr %s177, 8
          %s179 = scalar_lea.vmem [#allocation6], %s178
          %s181 = ssub.s32 128, 128
          %182 = vsyncadd %s176, %s181
          %s183 = smul.addr %s17, 64
          %s184 = scalar_lea.hbm %s0, %s183
          %s185 = sshll.u32 %s179, 4
          %s186 = int_to_ptr.vmem [resolvable:$true] %s185
          %191 = dma.hbm_to_vmem [thread:$0]  %s184, 128, %s186, %s176, 128, 64, 4
        $region20: #{tpu_custom_call.1} parent=15 // pred_fallthru
          _
        // Predicated region
        $region21: #{tpu_custom_call.1} parent=15 // pred_check
          %p192 = pneg %p63
        $region22: #{tpu_custom_call.1} parent=15 // pred_check_branch
          %194 = sbr.rel (%p192) target = $region24
        $region23: #{tpu_custom_call.1} parent=15 // pred_region
          %p195 = scmp.lt.s32.totalorder %s17, 1
          %s196 = scalar_select %p195, %s17, 1
          %s197 = scalar_lea.vmem %s1, %s196
        $region24: #{tpu_custom_call.1} parent=15 // pred_fallthru
          _
      $region16: #{tpu_custom_call.1} parent=5 // pred_fallthru
        _
      %p198 = scmp.le.s32.totalorder 1, %s17
      %p199 = scmp.lt.s32.totalorder %s17, 3
      %p200 = pnand %p198, %p199
      %p201 = pneg %p200
      // Predicated region
      $region25: #{tpu_custom_call.1} parent=5 // pred_check
        _
      $region26: #{tpu_custom_call.1} parent=5 // pred_check_branch
        %203 = sbr.rel (%p200) target = $region28
      $region27: #{tpu_custom_call.1} parent=5 // pred_region
        %s204 = ssub.s32 %s17, 1
        %s205 = sand.u32 %s30, 1
        %s206 = scalar_lea.sflag [#allocation7], %s205
        %s207 = sand.u32 %s30, 1
        %s208 = smul.addr %s207, 8
        %s209 = scalar_lea.vmem [#allocation6], %s208
        // Predicated region
        $region29: #{tpu_custom_call.1} parent=27 // pred_check
          %p210 = pneg %p43
        $region30: #{tpu_custom_call.1} parent=27 // pred_check_branch
          %212 = sbr.rel (%p210) target = $region32
        $region31: #{tpu_custom_call.1} parent=27 // pred_region
          %213 = dma.done %s206, 128
        $region32: #{tpu_custom_call.1} parent=27 // pred_fallthru
          _
        %s214 = sand.u32 %s30, 1
        %s215 = scalar_lea.sflag [#allocation7], %s214
        %s216 = sand.u32 %s30, 1
        %s217 = smul.addr %s216, 8
        %s218 = scalar_lea.vmem [#allocation6], %s217
        %p219 = pneg %p43
        %p220 = pneg %p40
        %p221 = scmp.lt.s32.totalorder %s22, 1
        %s222 = scalar_select %p221, %s22, 1
        %s223 = scalar_lea.vmem %s1, %s222
        %p224 = pneg %p69
        %p225 = pneg %p66
        %p226 = pneg %p90
        %p227 = pneg %p87
        %p228 = pneg %p111
        %p229 = pneg %p108
        %p230 = pneg %p132
        %p231 = pneg %p129
        %p232 = pneg %p153
        %p233 = pneg %p150
        %p234 = scmp.lt.s32.totalorder %s22, 1
        %s235 = scalar_select %p234, %s22, 1
        %s236 = scalar_lea.vmem %s1, %s235
        %p237 = scmp.eq.s32.totalorder %s22, 0
        // Predicated region
        $region33: #{tpu_custom_call.1} parent=27 // pred_check
          %p238 = pneg %p237
        $region34: #{tpu_custom_call.1} parent=27 // pred_check_branch
          %240 = sbr.rel (%p238) target = $region36
        $region35: #{tpu_custom_call.1} parent=27 // pred_region
          %241 = vst [vmem:[#allocation2] sm:$0xf] 0.0
          %242 = vst [vmem:[#allocation2 + $0x4] sm:$0xf] 0.0
          %243 = vst [vmem:[#allocation3] sm:$0xf] 0.0
          %244 = vst [vmem:[#allocation3 + $0x4] sm:$0xf] 0.0
          %245 = vst [vmem:[#allocation4] sm:$0x3] 0.0
          %246 = vst [vmem:[#allocation5] sm:$0x3] 0.0
        $region36: #{tpu_custom_call.1} parent=27 // pred_fallthru
          _
        %v247 = vlaneseq
        %v248 = vshrl.u32 %v247, 7
        %v249 = vld [vmem:[#allocation2] sm:$0xf]
        %v250 = vld [vmem:[#allocation2 + $0x4] sm:$0xf]
        %v251 = vld [vmem:[#allocation3] sm:$0xf]
        %v252 = vld [vmem:[#allocation3 + $0x4] sm:$0xf]
        %v253 = vld [vmem:[#allocation4] sm:$0x3]
        %v254 = vld [vmem:[#allocation5] sm:$0x3]
        %v255 = vld [vmem:[%s209] sm:$0xf]
        %v256 = vld [vmem:[%s209 + $0x4] sm:$0xf]
        %v257 = vld [vmem:[%s236] sm:$0x1]
        %v258 = vunpack.c.0.s8 %v257
        %v260 = vunpack.c.l.s4 1966171168
        %v261 = vunpack.c.0.s8 %v260
        %v262 = vlaneseq
        %v263 = vshrl.u32 %v262, 7
        %v264 = vsub.s32 %v261, %v263
        %v265 = vrot.slane %v258, %v264
        %v266 = vcombine.high %v265, %v265
        %v268 = vunpack.c.l.s4 1966171168
        %v269 = vunpack.c.0.s8 %v268
        %v270 = vlaneseq
        %v271 = vshrl.u32 %v270, 7
        %v272 = vsub.s32 %v269, %v271
        %v273 = vrot.slane %v265, %v272
        %v275 = vunpack.c.l.s4 1966171168
        %v276 = vunpack.c.0.s8 %v275
        %v277 = vlaneseq
        %v278 = vshrl.u32 %v277, 7
        %v279 = vsub.s32 %v276, %v278
        %v280 = vrot.slane %v266, %v279
        %v281 = vlaneseq
        %v282 = vshrl.u32 %v281, 7
        %v283 = vsub.s32 0, %v282
        %v284 = vrot.slane %v273, %v283
        %v285 = vlaneseq
        %v286 = vshrl.u32 %v285, 7
        %v287 = vsub.s32 0, %v286
        %v288 = vrot.slane %v280, %v287
        %vm289 = vcmp.eq.s32.totalorder %v284, %v248
        %vm290 = vcmp.eq.s32.totalorder %v288, %v248
        %v291 = vsel %vm289, 1, 0
        %v292 = vsel %vm290, 1, 0
        %v293 = vcvt.s32.f32 %v291
        %v294 = vcvt.s32.f32 %v292
        %v295 = vmul.f32 %v255, %v293
        %v296 = vmul.f32 %v256, %v294
        %v297 = vadd.f32 %v249, %v295
        %v298 = vadd.f32 %v250, %v296
        %v299 = vmul.f32 %v255, %v255
        %v300 = vmul.f32 %v256, %v256
        %v301 = vadd.f32 %v299, %v293
        %v302 = vadd.f32 %v300, %v294
        %v303 = vadd.f32 %v251, %v301
        %v304 = vadd.f32 %v252, %v302
        %vm305 = vcmask 1043456
        %v306 = vsel %vm305, %v255, 0.0
        %v307 = vrot.slane %v306, 4
        %v308 = vadd.f32 %v306, %v307
        %v309 = vrot.slane %v308, 2
        %v310 = vadd.f32 %v308, %v309
        %v311 = vrot.slane %v310, 1
        %v312 = vadd.f32 %v310, %v311
        %v313 = vsel %vm305, %v256, 0.0
        %v314 = vrot.slane %v313, 4
        %v315 = vadd.f32 %v313, %v314
        %v316 = vrot.slane %v315, 2
        %v317 = vadd.f32 %v315, %v316
        %v318 = vrot.slane %v317, 1
        %v319 = vadd.f32 %v317, %v318
        %v320 = vsel %vm305, %v295, 0.0
        %v321 = vrot.slane %v320, 4
        %v322 = vadd.f32 %v320, %v321
        %v323 = vrot.slane %v322, 2
        %v324 = vadd.f32 %v322, %v323
        %v325 = vrot.slane %v324, 1
        %v326 = vadd.f32 %v324, %v325
        %v327 = vsel %vm305, %v296, 0.0
        %v328 = vrot.slane %v327, 4
        %v329 = vadd.f32 %v327, %v328
        %v330 = vrot.slane %v329, 2
        %v331 = vadd.f32 %v329, %v330
        %v332 = vrot.slane %v331, 1
        %v333 = vadd.f32 %v331, %v332
        %v334 = vmul.f32 %v312, 3.3333333e-06
        %v335 = vmul.f32 %v319, 3.3333333e-06
        %v336 = vmul.f32 %v326, 0.99998665
        %v337 = vmul.f32 %v333, 0.99998665
        %v338 = vadd.f32 %v334, %v336
        %v339 = vadd.f32 %v335, %v337
        %v340 = vadd.f32 %v338, 1e-05
        %v341 = vadd.f32 %v339, 1e-05
        %v342 = vsub.f32 1.0, %v340
        %v343 = vsub.f32 1.0, %v341
        %v344 = vmul.f32 %v342, %v342
        %v345 = vmul.f32 %v343, %v343
        %vm348 = vcmask 1041409
        %v349 = vsel %vm348, %v345, %v344
        %v351 = vadd.f32 %v253, %v349
        %v354 = vrot.slane %v294, 7
        %v355 = vsel %vm348, %v354, %v293
        %v357 = vadd.f32 %v254, %v355
        %358 = vst [vmem:[#allocation2] sm:$0xf] %v297
        %359 = vst [vmem:[#allocation2 + $0x4] sm:$0xf] %v298
        %360 = vst [vmem:[#allocation3] sm:$0xf] %v303
        %361 = vst [vmem:[#allocation3 + $0x4] sm:$0xf] %v304
        %362 = vst [vmem:[#allocation4] sm:$0x3] %v351
        %363 = vst [vmem:[#allocation5] sm:$0x3] %v357
        %p364 = scmp.eq.s32.totalorder %s22, 1
        // Predicated region
        $region37: #{tpu_custom_call.1} parent=27 // pred_check
          %p365 = pneg %p364
        $region38: #{tpu_custom_call.1} parent=27 // pred_check_branch
          %367 = sbr.rel (%p365) target = $region40
        $region39: #{tpu_custom_call.1} parent=27 // pred_region
          %v368 = vld [vmem:[#allocation2] sm:$0xf]
          %v369 = vld [vmem:[#allocation2 + $0x4] sm:$0xf]
          %v370 = vsel %vm305, %v368, 0.0
          %371 = vadd.xlane.f32.xlu0 %v370
          %v372 = vpop.xlane.xlu0 %371
          %v373 = vsel %vm305, %v369, 0.0
          %374 = vadd.xlane.f32.xlu0 %v373
          %v375 = vpop.xlane.xlu0 %374
          %v378 = vlaneseq
          %v379 = vand.u32 %v378, 127
          %v380 = vlaneseq
          %v381 = vshrl.u32 %v380, 7
          %v382 = vsub.s32 %v379, %v381
          %v383 = vrot.slane %v372, %v382
          %v384 = vlaneseq
          %v385 = vshrl.u32 %v384, 7
          %v386 = vsub.s32 %v379, %v385
          %v387 = vrot.slane %v375, %v386
          %v388 = vsel %vm348, %v387, %v383
          %vm390 = vcmask 25600
          %391 = vst.msk [vmem:[#allocation9] sm:$0x3] %vm390, %v388
          %v392 = vld [vmem:[#allocation3] sm:$0xf]
          %v393 = vld [vmem:[#allocation3 + $0x4] sm:$0xf]
          %v394 = vsel %vm305, %v392, 0.0
          %395 = vadd.xlane.f32.xlu0 %v394
          %v396 = vpop.xlane.xlu0 %395
          %v397 = vsel %vm305, %v393, 0.0
          %398 = vadd.xlane.f32.xlu0 %v397
          %v399 = vpop.xlane.xlu0 %398
          %v402 = vlaneseq
          %v403 = vshrl.u32 %v402, 7
          %v404 = vsub.s32 %v379, %v403
          %v405 = vrot.slane %v396, %v404
          %v406 = vlaneseq
          %v407 = vshrl.u32 %v406, 7
          %v408 = vsub.s32 %v379, %v407
          %v409 = vrot.slane %v399, %v408
          %v410 = vsel %vm348, %v409, %v405
          %412 = vst.msk [vmem:[#allocation10] sm:$0x3] %vm390, %v410
          %v413 = vld [vmem:[#allocation4] sm:$0x3]
          %vm414 = vcmask 1041408
          %v415 = vsel %vm414, %v413, 0.0
          %416 = vadd.xlane.f32.xlu0 %v415
          %v417 = vpop.xlane.xlu0 %416
          %vm418 = vcmask 1024
          %419 = vst.msk [vmem:[%s4] sm:$0x3] %vm418, %v417
          %v420 = vld [vmem:[#allocation5] sm:$0x3]
          %v421 = vsel %vm414, %v420, 0.0
          %422 = vadd.xlane.f32.xlu0 %v421
          %v423 = vpop.xlane.xlu0 %422
          %424 = vst.msk [vmem:[%s5] sm:$0x3] %vm418, %v423
        $region40: #{tpu_custom_call.1} parent=27 // pred_fallthru
          _
        // Predicated region
        $region41: #{tpu_custom_call.1} parent=27 // pred_check
          %p425 = pneg %p87
        $region42: #{tpu_custom_call.1} parent=27 // pred_check_branch
          %427 = sbr.rel (%p425) target = $region44
        $region43: #{tpu_custom_call.1} parent=27 // pred_region
          %s429 = ssub.s32 32, 32
          %430 = vsyncadd [#allocation8], %s429
          %s432 = sshll.u32 [#allocation9], 4
          %s433 = int_to_ptr.vmem [resolvable:$true] %s432
          %435 = dma.vmem_to_hbm [thread:$0]  %s433, 32, %s2, [#allocation8]
        $region44: #{tpu_custom_call.1} parent=27 // pred_fallthru
          _
        // Predicated region
        $region45: #{tpu_custom_call.1} parent=27 // pred_check
          %p436 = pneg %p108
        $region46: #{tpu_custom_call.1} parent=27 // pred_check_branch
          %438 = sbr.rel (%p436) target = $region48
        $region47: #{tpu_custom_call.1} parent=27 // pred_region
          %s440 = ssub.s32 32, 32
          %441 = vsyncadd [#allocation11], %s440
          %s443 = sshll.u32 [#allocation10], 4
          %s444 = int_to_ptr.vmem [resolvable:$true] %s443
          %446 = dma.vmem_to_hbm [thread:$0]  %s444, 32, %s3, [#allocation11]
        $region48: #{tpu_custom_call.1} parent=27 // pred_fallthru
          _
        // Predicated region
        $region49: #{tpu_custom_call.1} parent=27 // pred_check
          %p447 = pneg %p129
        $region50: #{tpu_custom_call.1} parent=27 // pred_check_branch
          %449 = sbr.rel (%p447) target = $region52
        $region51: #{tpu_custom_call.1} parent=27 // pred_region
          _
        $region52: #{tpu_custom_call.1} parent=27 // pred_fallthru
          _
        // Predicated region
        $region53: #{tpu_custom_call.1} parent=27 // pred_check
          %p450 = pneg %p150
        $region54: #{tpu_custom_call.1} parent=27 // pred_check_branch
          %452 = sbr.rel (%p450) target = $region56
        $region55: #{tpu_custom_call.1} parent=27 // pred_region
          _
        $region56: #{tpu_custom_call.1} parent=27 // pred_fallthru
          _
        // Predicated region
        $region57: #{tpu_custom_call.1} parent=27 // pred_check
          %p453 = pneg %p87
        $region58: #{tpu_custom_call.1} parent=27 // pred_check_branch
          %455 = sbr.rel (%p453) target = $region60
        $region59: #{tpu_custom_call.1} parent=27 // pred_region
          %456 = dma.done [#allocation8], 32
        $region60: #{tpu_custom_call.1} parent=27 // pred_fallthru
          _
        // Predicated region
        $region61: #{tpu_custom_call.1} parent=27 // pred_check
          %p457 = pneg %p108
        $region62: #{tpu_custom_call.1} parent=27 // pred_check_branch
          %459 = sbr.rel (%p457) target = $region64
        $region63: #{tpu_custom_call.1} parent=27 // pred_region
          %460 = dma.done [#allocation11], 32
        $region64: #{tpu_custom_call.1} parent=27 // pred_fallthru
          _
        // Predicated region
        $region65: #{tpu_custom_call.1} parent=27 // pred_check
          %p461 = pneg %p129
        $region66: #{tpu_custom_call.1} parent=27 // pred_check_branch
          %463 = sbr.rel (%p461) target = $region68
        $region67: #{tpu_custom_call.1} parent=27 // pred_region
          _
        $region68: #{tpu_custom_call.1} parent=27 // pred_fallthru
          _
        // Predicated region
        $region69: #{tpu_custom_call.1} parent=27 // pred_check
          %p464 = pneg %p150
        $region70: #{tpu_custom_call.1} parent=27 // pred_check_branch
          %466 = sbr.rel (%p464) target = $region72
        $region71: #{tpu_custom_call.1} parent=27 // pred_region
          _
        $region72: #{tpu_custom_call.1} parent=27 // pred_fallthru
          _
      $region28: #{tpu_custom_call.1} parent=5 // pred_fallthru
        _
      %p467 = scmp.le.s32.totalorder 2, %s17
      // Predicated region
      $region73: #{tpu_custom_call.1} parent=5 // pred_check
        %p468 = pneg %p467
      $region74: #{tpu_custom_call.1} parent=5 // pred_check_branch
        %470 = sbr.rel (%p468) target = $region76
      $region75: #{tpu_custom_call.1} parent=5 // pred_region
        %s471 = ssub.s32 %s17, 2
      $region76: #{tpu_custom_call.1} parent=5 // pred_fallthru
        _
    $region6: #{tpu_custom_call.1} parent=1 // loop_footer
      %s21 = sadd.s32 1, %s17
    $region7: #{tpu_custom_call.1} parent=1 // loop_footer_branch
      %16 = sbr.rel target = $region3
    $region8: #{tpu_custom_call.1} parent=1 // loop_exit
      _
    %472 = vsyncpa [#allocation7], 1
    %s473 = scalar_lea.sflag [#allocation7], 1
    %474 = vsyncpa %s473, 1
    %475 = vsyncpa [#allocation8], 1
    %s476 = scalar_lea.sflag [#allocation8], 1
    %477 = vsyncpa %s476, 1
    %478 = vsyncpa [#allocation11], 1

</llo_original>
